<compile_context>
chip_gen: v7x
topology: tpu7x:2x2x1
jax: 0.10.0
libtpu: 0.0.40
codegen_flags: <defaults>
</compile_context>

<pallas_src>
import functools
import math

import jax
import jax.numpy as jnp
from jax import lax
from jax.experimental import pallas as pl
from jax.experimental.pallas import tpu as pltpu

_NEG_INF = -1e30  # finite "minus infinity": avoids NaN from exp(-inf - (-inf))


def _largest_divisor(n, target):
    """Largest divisor of n that is <= target (keeps grids exact, no padding)."""
    t = max(1, min(n, target))
    while n % t:
        t -= 1
    return t


# ----------------------------------------------------------------------------
# Tiled linear projection kernel (bf16 MXU matmul, f32 accumulation)
# ----------------------------------------------------------------------------
def _linear_kernel(x_ref, w_ref, o_ref, acc_ref):
    @pl.when(pl.program_id(2) == 0)
    def _():
        acc_ref[...] = jnp.zeros(acc_ref.shape, acc_ref.dtype)

    acc_ref[...] += jnp.dot(
        x_ref[...], w_ref[...], preferred_element_type=jnp.float32
    )

    @pl.when(pl.program_id(2) == pl.num_programs(2) - 1)
    def _():
        o_ref[...] = acc_ref[...].astype(o_ref.dtype)


def linear_pallas(x2d, w, *, tm=256, tn=256, tk=512, out_dtype=jnp.float32):
    """x2d: (M, K); w: (K, N) (stored as W^T of the torch nn.Linear weight)."""
    M, K = x2d.shape
    N = w.shape[1]
    tm = _largest_divisor(M, tm)
    tn = _largest_divisor(N, tn)
    tk = _largest_divisor(K, tk)
    grid = (M // tm, N // tn, K // tk)

    return pl.pallas_call(
        _linear_kernel,
        out_shape=jax.ShapeDtypeStruct((M, N), out_dtype),
        grid_spec=pltpu.PrefetchScalarGridSpec(
            num_scalar_prefetch=0,
            grid=grid,
            in_specs=[
                pl.BlockSpec((tm, tk), lambda i, j, k: (i, k)),
                pl.BlockSpec((tk, tn), lambda i, j, k: (k, j)),
            ],
            out_specs=pl.BlockSpec((tm, tn), lambda i, j, k: (i, j)),
            scratch_shapes=[pltpu.VMEM((tm, tn), jnp.float32)],
        ),
        compiler_params=pltpu.CompilerParams(
            dimension_semantics=("parallel", "parallel", "arbitrary"),
            vmem_limit_bytes=64 * 1024 * 1024,
        ),
    )(x2d.astype(jnp.bfloat16), w.astype(jnp.bfloat16))


# ----------------------------------------------------------------------------
# Flash-attention kernel (online softmax, KV-streamed, GQA via index_map)
# ----------------------------------------------------------------------------
def _flash_attn_kernel(q_ref, k_ref, v_ref, o_ref, m_sc, l_sc, acc_sc,
                       *, scale, tq, tkb, causal):
    qi = pl.program_id(2)
    ki = pl.program_id(3)

    @pl.when(ki == 0)
    def _():
        m_sc[...] = jnp.full(m_sc.shape, _NEG_INF, m_sc.dtype)
        l_sc[...] = jnp.zeros(l_sc.shape, l_sc.dtype)
        acc_sc[...] = jnp.zeros(acc_sc.shape, acc_sc.dtype)

    def process_block():
        # scores (tq, tkb): contract last dims directly -> no k.T transpose.
        s = lax.dot_general(
            q_ref[...], k_ref[...],
            (((1,), (1,)), ((), ())),
            preferred_element_type=jnp.float32,
        ) * scale

        if causal:
            q_pos = qi * tq + lax.broadcasted_iota(jnp.int32, (tq, tkb), 0)
            k_pos = ki * tkb + lax.broadcasted_iota(jnp.int32, (tq, tkb), 1)
            s = jnp.where(q_pos >= k_pos, s, _NEG_INF)

        m_prev = m_sc[...]
        m_new = jnp.maximum(m_prev, jnp.max(s, axis=-1, keepdims=True))
        alpha = jnp.exp(m_prev - m_new)
        p = jnp.exp(s - m_new)  # unnormalized probabilities (never hit HBM)

        l_sc[...] = alpha * l_sc[...] + jnp.sum(p, axis=-1, keepdims=True)
        acc_sc[...] = alpha * acc_sc[...] + lax.dot_general(
            p.astype(v_ref.dtype), v_ref[...],
            (((1,), (0,)), ((), ())),
            preferred_element_type=jnp.float32,
        )
        m_sc[...] = m_new

    if causal:
        # Skip KV blocks that lie entirely above the causal diagonal.
        pl.when(ki * tkb <= qi * tq + (tq - 1))(process_block)
    else:
        process_block()

    @pl.when(ki == pl.num_programs(3) - 1)
    def _():
        o_ref[...] = (
            acc_sc[...] * pl.reciprocal(l_sc[...], approx=True)
        ).astype(o_ref.dtype)


def flash_attention_pallas(q, k, v, *, scale, causal,
                           tq_target=256, tk_target=256):
    """q: (B, H, Sq, Dk); k: (B, Hkv, Sk, Dk); v: (B, Hkv, Sk, Dh) -> (B, H, Sq, Dh)."""
    B, H, Sq, Dk = q.shape
    Hkv, Sk = k.shape[1], k.shape[2]
    Dh = v.shape[3]
    n_rep = H // Hkv

    tq = _largest_divisor(Sq, tq_target)
    tkb = _largest_divisor(Sk, tk_target)
    grid = (B, H, Sq // tq, Sk // tkb)

    kernel = functools.partial(
        _flash_attn_kernel, scale=scale, tq=tq, tkb=tkb, causal=causal
    )

    return pl.pallas_call(
        kernel,
        out_shape=jax.ShapeDtypeStruct((B, H, Sq, Dh), jnp.bfloat16),
        grid_spec=pltpu.PrefetchScalarGridSpec(
            num_scalar_prefetch=0,
            grid=grid,
            in_specs=[
                pl.BlockSpec((None, None, tq, Dk),
                             lambda b, h, qi, ki: (b, h, qi, 0)),
                # GQA: kv head chosen in the index_map -> no jnp.repeat of K/V.
                pl.BlockSpec((None, None, tkb, Dk),
                             lambda b, h, qi, ki: (b, h // n_rep, ki, 0)),
                pl.BlockSpec((None, None, tkb, Dh),
                             lambda b, h, qi, ki: (b, h // n_rep, ki, 0)),
            ],
            out_specs=pl.BlockSpec((None, None, tq, Dh),
                                   lambda b, h, qi, ki: (b, h, qi, 0)),
            scratch_shapes=[
                pltpu.VMEM((tq, 1), jnp.float32),   # running max
                pltpu.VMEM((tq, 1), jnp.float32),   # running denominator
                pltpu.VMEM((tq, Dh), jnp.float32),  # running output accumulator
            ],
        ),
        compiler_params=pltpu.CompilerParams(
            dimension_semantics=("parallel", "parallel", "parallel", "arbitrary"),
            vmem_limit_bytes=64 * 1024 * 1024,
        ),
    )(q.astype(jnp.bfloat16), k.astype(jnp.bfloat16), v.astype(jnp.bfloat16))


# ----------------------------------------------------------------------------
# Plain-JAX glue (RoPE)
# ----------------------------------------------------------------------------
def apply_rotary_emb_jax(xq, xk, freqs_cos, freqs_sin):
    """xq/xk: (B, S, H, D); freqs: (S, D//2). Matches torch apply_rotary_emb."""
    def rot(x):
        shape = x.shape
        xp = x.astype(jnp.float32).reshape(shape[:-1] + (shape[-1] // 2, 2))
        xr, xi = xp[..., 0], xp[..., 1]
        c = freqs_cos[None, :, None, :]
        s = freqs_sin[None, :, None, :]
        out_r = xr * c - xi * s
        out_i = xr * s + xi * c
        out = jnp.stack([out_r, out_i], axis=-1).reshape(shape)
        return out.astype(x.dtype)

    return rot(xq), rot(xk)


# ----------------------------------------------------------------------------
# Forward pass (matches Attention.forward, default need_weights=False path)
# ----------------------------------------------------------------------------
def attention_forward(params, query, key, value,
                      freqs_cos=None, freqs_sin=None, is_causal=False):
    cfg = params["cfg"]
    B, Sq, _ = query.shape
    Sk = key.shape[1]
    H, Hkv = cfg["n_heads"], cfg["n_kv_heads"]
    Dk, Dh = cfg["key_dim"], cfg["head_dim"]

    # ---- projections (tiled bf16 Pallas matmuls) ----
    xq = linear_pallas(query.reshape(B * Sq, -1), params["wq"]).reshape(B, Sq, H, Dk)
    xk = linear_pallas(key.reshape(B * Sk, -1), params["wk"]).reshape(B, Sk, Hkv, Dk)
    xv = linear_pallas(value.reshape(B * Sk, -1), params["wv"]).reshape(B, Sk, Hkv, Dh)

    # ---- rotary embeddings (plain-JAX elementwise preprocessing) ----
    if freqs_cos is not None and freqs_sin is not None:
        xq, xk = apply_rotary_emb_jax(xq, xk, freqs_cos, freqs_sin)

    # (B, S, H, D) -> (B, H, S, D); K/V keep only n_kv_heads (no repeat).
    xq = jnp.transpose(xq, (0, 2, 1, 3))
    xk = jnp.transpose(xk, (0, 2, 1, 3))
    xv = jnp.transpose(xv, (0, 2, 1, 3))

    # ---- fused flash-attention kernel ----
    out = flash_attention_pallas(xq, xk, xv,
                                 scale=cfg["attn_scale"], causal=is_causal)

    # (B, H, Sq, Dh) -> (B, Sq, H*Dh)
    out = jnp.transpose(out, (0, 2, 1, 3)).reshape(B * Sq, H * Dh)

    # ---- output projection ----
    out = linear_pallas(out, params["wo"]).reshape(B, Sq, H * Dh)

    # attn_dropout / resid_dropout are identities at dropout=0.0 (eval).
    # TODO(synk): need_weights=True (dense Sq x Sk probability output) and an
    #             arbitrary boolean attn_mask are not implemented in the flash
    #             kernel; default forward path returns (output, None).
    return out, None


# ----------------------------------------------------------------------------
# Deterministic parameter init (nn.Linear shapes; weights stored as W^T)
# ----------------------------------------------------------------------------
def init_params(rng, d_model, n_heads, n_kv_heads=None, key_dim=None, total_n_heads=None):
    n_kv_heads = n_heads if n_kv_heads is None else n_kv_heads
    total_n_heads = n_heads if total_n_heads is None else total_n_heads
    head_dim = d_model // total_n_heads
    key_dim = key_dim if key_dim is not None else head_dim
    n_rep_kv = n_heads // n_kv_heads
    assert n_rep_kv * n_kv_heads == n_heads
    assert total_n_heads * head_dim == d_model

    def lin_w(k, fan_in, fan_out):
        bound = 1.0 / math.sqrt(fan_in)
        return jax.random.uniform(k, (fan_in, fan_out), jnp.float32, -bound, bound)

    k1, k2, k3, k4 = jax.random.split(rng, 4)
    return {
        "wq": lin_w(k1, d_model, n_heads * key_dim),
        "wk": lin_w(k2, d_model, n_kv_heads * key_dim),
        "wv": lin_w(k3, d_model, n_kv_heads * head_dim),
        "wo": lin_w(k4, n_heads * head_dim, n_heads * head_dim),
        "cfg": {
            "d_model": d_model,
            "n_heads": n_heads,
            "n_kv_heads": n_kv_heads,
            "n_rep_kv": n_rep_kv,
            "key_dim": key_dim,
            "head_dim": head_dim,
            "attn_scale": 1.0 / math.sqrt(head_dim),
        },
    }


# ----------------------------------------------------------------------------
# Pure-JAX f32 reference (for correctness check)
# ----------------------------------------------------------------------------
def reference_forward(params, query, key, value, freqs_cos, freqs_sin, is_causal):
    cfg = params["cfg"]
    B, Sq, _ = query.shape
    Sk = key.shape[1]
    xq = (query @ params["wq"]).reshape(B, Sq, cfg["n_heads"], cfg["key_dim"])
    xk = (key @ params["wk"]).reshape(B, Sk, cfg["n_kv_heads"], cfg["key_dim"])
    xv = (value @ params["wv"]).reshape(B, Sk, cfg["n_kv_heads"], cfg["head_dim"])
    xq, xk = apply_rotary_emb_jax(xq, xk, freqs_cos, freqs_sin)
    if cfg["n_rep_kv"] != 1:
        xk = jnp.repeat(xk, cfg["n_rep_kv"], axis=2)
        xv = jnp.repeat(xv, cfg["n_rep_kv"], axis=2)
    xq = jnp.transpose(xq, (0, 2, 1, 3))
    xk = jnp.transpose(xk, (0, 2, 1, 3))
    xv = jnp.transpose(xv, (0, 2, 1, 3))
    scores = jnp.einsum("bhqd,bhkd->bhqk", xq, xk) * cfg["attn_scale"]
    if is_causal:
        causal = jnp.tril(jnp.ones((Sq, Sk), dtype=bool))
        scores = jnp.where(causal, scores, -jnp.inf)
    probs = jax.nn.softmax(scores, axis=-1)
    out = jnp.einsum("bhqk,bhkd->bhqd", probs, xv)
    out = jnp.transpose(out, (0, 2, 1, 3)).reshape(B, Sq, -1)
    return out @ params["wo"]


# ----------------------------------------------------------------------------
if __name__ == "__main__":
    B, S, D_MODEL = 2, 8, 32
    N_HEADS, N_KV_HEADS = 4, 2          # grouped-query attention (n_rep_kv = 2)

    root = jax.random.PRNGKey(0)
    k_param, k_x = jax.random.split(root)
    params = init_params(k_param, D_MODEL, N_HEADS, n_kv_heads=N_KV_HEADS)

    # self-attention input
    x = jax.random.normal(k_x, (B, S, D_MODEL), jnp.float32)

    # RoPE frequencies, shape (S, key_dim // 2)
    key_dim = params["cfg"]["key_dim"]
    inv_freq = 1.0 / (10000.0 ** (jnp.arange(0, key_dim, 2, dtype=jnp.float32) / key_dim))
    t = jnp.arange(S, dtype=jnp.float32)
    angles = jnp.outer(t, inv_freq)              # (S, key_dim//2)
    freqs_cos, freqs_sin = jnp.cos(angles), jnp.sin(angles)

    out, scores = attention_forward(
        params, x, x, x, freqs_cos=freqs_cos, freqs_sin=freqs_sin, is_causal=True
    )
    out = jax.block_until_ready(out)

    ref_out = reference_forward(params, x, x, x, freqs_cos, freqs_sin, is_causal=True)

    assert out.shape == (B, S, N_HEADS * params["cfg"]["head_dim"])
    assert scores is None  # default need_weights=False path
    # Kernel runs matmuls in bf16 with f32 accumulation -> loose tolerance vs f32 ref.
    assert jnp.allclose(out, ref_out, atol=5e-2, rtol=5e-2), (
        float(jnp.max(jnp.abs(out - ref_out)))
    )

    print("KERNEL_OK")
</pallas_src>

<mosaic_0001>
module attributes {stable_mosaic.version = 11 : i64} {
  func.func @_linear_kernel(%arg0: i32, %arg1: i32, %arg2: i32, %arg3: memref<16x32xbf16, #tpu.memory_space<vmem>>, %arg4: memref<32x32xbf16, #tpu.memory_space<vmem>>, %arg5: memref<16x32xf32, #tpu.memory_space<vmem>>, %arg6: memref<16x32xf32, #tpu.memory_space<vmem>>) attributes {dimension_semantics = [#tpu.dimension_semantics<parallel>, #tpu.dimension_semantics<parallel>, #tpu.dimension_semantics<arbitrary>], iteration_bounds = array<i64: 1, 1, 1>, scalar_prefetch = 0 : i64, scratch_operands = 1 : i64, tpu.core_type = #tpu.core_type<tc>, window_params = [{transform_indices = @transform_0, window_bounds = array<i64: 16, 32>}, {transform_indices = @transform_1, window_bounds = array<i64: 32, 32>}, {transform_indices = @transform_2, window_bounds = array<i64: 16, 32>}]} {
    %c0_i32 = arith.constant 0 : i32
    %0 = arith.cmpi eq, %arg2, %c0_i32 : i32
    %1 = arith.extui %0 : i1 to i32
    %c0_i32_0 = arith.constant 0 : i32
    %2 = arith.cmpi ne, %1, %c0_i32_0 : i32
    scf.if %2 {
      %cst_10 = arith.constant 0.000000e+00 : f32
      %12 = vector.broadcast %cst_10 : f32 to vector<16x32xf32>
      %c0_11 = arith.constant 0 : index
      %c0_12 = arith.constant 0 : index
      %13 = vector.load %arg6[%c0_11, %c0_12] : memref<16x32xf32, #tpu.memory_space<vmem>>, vector<16x32xf32>
      tpu.vector_store %arg6[%c0_11, %c0_12], %12 {strides = array<i32>} : memref<16x32xf32, #tpu.memory_space<vmem>>, vector<16x32xf32>,
    } else {
    }
    %c0 = arith.constant 0 : index
    %c0_1 = arith.constant 0 : index
    %3 = vector.load %arg6[%c0, %c0_1] : memref<16x32xf32, #tpu.memory_space<vmem>>, vector<16x32xf32>
    %c0_2 = arith.constant 0 : index
    %c0_3 = arith.constant 0 : index
    %4 = vector.load %arg3[%c0_2, %c0_3] : memref<16x32xbf16, #tpu.memory_space<vmem>>, vector<16x32xbf16>
    %c0_4 = arith.constant 0 : index
    %c0_5 = arith.constant 0 : index
    %5 = vector.load %arg4[%c0_4, %c0_5] : memref<32x32xbf16, #tpu.memory_space<vmem>>, vector<32x32xbf16>
    %cst = arith.constant dense<0.000000e+00> : vector<16x32xf32>
    %6 = tpu.matmul %4, %5, %cst {dimension_numbers = #tpu.dot_dimension_numbers<[1], [0], [0], [1], [0, 0, 1, 1], [], []>} : vector<16x32xbf16>, vector<32x32xbf16>, vector<16x32xf32> -> vector<16x32xf32>
    %7 = arith.addf %3, %6 : vector<16x32xf32>
    %c0_6 = arith.constant 0 : index
    %c0_7 = arith.constant 0 : index
    %8 = vector.load %arg6[%c0_6, %c0_7] : memref<16x32xf32, #tpu.memory_space<vmem>>, vector<16x32xf32>
    tpu.vector_store %arg6[%c0_6, %c0_7], %7 {strides = array<i32>} : memref<16x32xf32, #tpu.memory_space<vmem>>, vector<16x32xf32>,
    %c0_i32_8 = arith.constant 0 : i32
    %9 = arith.cmpi eq, %arg2, %c0_i32_8 : i32
    %10 = arith.extui %9 : i1 to i32
    %c0_i32_9 = arith.constant 0 : i32
    %11 = arith.cmpi ne, %10, %c0_i32_9 : i32
    scf.if %11 {
      %c0_10 = arith.constant 0 : index
      %c0_11 = arith.constant 0 : index
      %12 = vector.load %arg6[%c0_10, %c0_11] : memref<16x32xf32, #tpu.memory_space<vmem>>, vector<16x32xf32>
      %c0_12 = arith.constant 0 : index
      %c0_13 = arith.constant 0 : index
      %13 = vector.load %arg5[%c0_12, %c0_13] : memref<16x32xf32, #tpu.memory_space<vmem>>, vector<16x32xf32>
      tpu.vector_store %arg5[%c0_12, %c0_13], %12 {strides = array<i32>} : memref<16x32xf32, #tpu.memory_space<vmem>>, vector<16x32xf32>,
    } else {
    }
    return
  }
  func.func @transform_0(%arg0: i32, %arg1: i32, %arg2: i32) -> (i32, i32) {
    %c0_i32 = arith.constant 0 : i32
    return %arg0, %arg2 : i32, i32
  }
  func.func @transform_1(%arg0: i32, %arg1: i32, %arg2: i32) -> (i32, i32) {
    %c0_i32 = arith.constant 0 : i32
    return %arg2, %arg1 : i32, i32
  }
  func.func @transform_2(%arg0: i32, %arg1: i32, %arg2: i32) -> (i32, i32) {
    %c0_i32 = arith.constant 0 : i32
    return %arg0, %arg1 : i32, i32
  }
}

</mosaic_0001>

<llo_original>
// kernel: tpu_custom_call.1
$region0: #{tpu_custom_call.1}
  #allocation0 [shape = 'u32[]', space=smem, size = 0x4, offset = 0x4, fixed_abs, tag = 'smem constant byte address 0x4 - core index']
  #allocation1 [shape = 'u32[144,128]{1,0:T(1,128)}', space=vmem, size = 0x12000, scoped, tag = 'internal scratch']
  #allocation2 [shape = 'f32[16,32]{1,0:T(8,128)}', space=vmem, size = 0x2000, scoped, tag = 'scratch operand']
  %s0 = inlined_call_operand.hbm [shape: bf16[16,32], index: 0, kind: input, shape index: {}]
  %s1 = inlined_call_operand.hbm [shape: bf16[32,32], index: 1, kind: input, shape index: {}]
  %s2 = inlined_call_operand.hbm [shape: f32[16,32], index: 2, kind: output, shape index: {}]
  %s3 = sld [smem:[#allocation0]]
  $region34: #{tpu_custom_call.1} parent=0
    _
  %s5 = ssub.s32 1, %s3
  %s6 = scalar_select 0, %s5, %s3
  $region1: #{tpu_custom_call.1} parent=0
    #allocation3 [shape = 'u8[4096]{0}', space=vmem, size = 0x1000, scoped, tag = 'input window, operand 0, single buffered']
    #allocation4 [shape = 's32[1]{0}', space=sflag, size = 0x4, scoped, tag = 'scoped memory for tpu_custom_call.1']
    #allocation5 [shape = 's32[1]{0}', space=sflag, size = 0x4, scoped, tag = 'scoped memory for tpu_custom_call.1']
    #allocation6 [shape = 'u8[8192]{0}', space=vmem, size = 0x2000, scoped, tag = 'input window, operand 1, single buffered']
    #allocation7 [shape = 's32[1]{0}', space=sflag, size = 0x4, scoped, tag = 'scoped memory for tpu_custom_call.1']
    #allocation8 [shape = 'u8[8192]{0}', space=vmem, size = 0x2000, scoped, tag = 'output window, operand 0, single buffered']
    %7 = vsyncpa [#allocation4], 0
    %8 = vsyncpa [#allocation7], 0
    %9 = vsyncpa [#allocation5], 0
    // Predicated region
    $region2: #{tpu_custom_call.1} parent=1 // pred_check
      _
    $region3: #{tpu_custom_call.1} parent=1 // pred_check_branch
      %11 = sbr.rel (0) target = $region5
    $region4: #{tpu_custom_call.1} parent=1 // pred_region
      %s13 = ssub.s32 128, 128
      %14 = vsyncadd [#allocation4], %s13
      %s15 = sshll.u32 [#allocation3], 4
      %s16 = int_to_ptr.vmem [resolvable:$true] %s15
      %21 = dma.hbm_to_vmem [thread:$0]  %s0, 128, %s16, [#allocation4], 64, 64, 4
    $region5: #{tpu_custom_call.1} parent=1 // pred_fallthru
      _
    // Predicated region
    $region6: #{tpu_custom_call.1} parent=1 // pred_check
      _
    $region7: #{tpu_custom_call.1} parent=1 // pred_check_branch
      %23 = sbr.rel (0) target = $region9
    $region8: #{tpu_custom_call.1} parent=1 // pred_region
      %s25 = ssub.s32 256, 256
      %26 = vsyncadd [#allocation7], %s25
      %s27 = sshll.u32 [#allocation6], 4
      %s28 = int_to_ptr.vmem [resolvable:$true] %s27
      %33 = dma.hbm_to_vmem [thread:$0]  %s1, 256, %s28, [#allocation7], 64, 64, 4
    $region9: #{tpu_custom_call.1} parent=1 // pred_fallthru
      _
    // Predicated region
    $region10: #{tpu_custom_call.1} parent=1 // pred_check
      _
    $region11: #{tpu_custom_call.1} parent=1 // pred_check_branch
      %35 = sbr.rel (0) target = $region13
    $region12: #{tpu_custom_call.1} parent=1 // pred_region
      %36 = dma.done [#allocation4], 128
    $region13: #{tpu_custom_call.1} parent=1 // pred_fallthru
      _
    // Predicated region
    $region14: #{tpu_custom_call.1} parent=1 // pred_check
      _
    $region15: #{tpu_custom_call.1} parent=1 // pred_check_branch
      %38 = sbr.rel (0) target = $region17
    $region16: #{tpu_custom_call.1} parent=1 // pred_region
      %39 = dma.done [#allocation7], 256
    $region17: #{tpu_custom_call.1} parent=1 // pred_fallthru
      _
    %p41 = scmp.eq.s32.totalorder 0, 0
    // Predicated region
    $region18: #{tpu_custom_call.1} parent=1 // pred_check
      %p42 = pneg %p41
    $region19: #{tpu_custom_call.1} parent=1 // pred_check_branch
      %44 = sbr.rel (%p42) target = $region21
    $region20: #{tpu_custom_call.1} parent=1 // pred_region
      %vm45 = vcmask 261120
      %46 = vst.msk [vmem:[#allocation2] sm:$0xff] %vm45, 0.0
      %47 = vst.msk [vmem:[#allocation2 + $0x8] sm:$0xff] %vm45, 0.0
    $region21: #{tpu_custom_call.1} parent=1 // pred_fallthru
      _
    %v48 = vld [vmem:[#allocation2] sm:$0xff]
    %v49 = vld [vmem:[#allocation2 + $0x8] sm:$0xff]
    %v50 = vld [vmem:[#allocation3] sm:$0xf]
    %v51 = vld [vmem:[#allocation3 + $0x4] sm:$0xf]
    %v52 = vld [vmem:[#allocation6] sm:$0xf]
    %v53 = vld [vmem:[#allocation6 + $0x4] sm:$0xf]
    %v54 = vld [vmem:[#allocation6 + $0x8] sm:$0xf]
    %v55 = vld [vmem:[#allocation6 + $0xc] sm:$0xf]
    %v58 = vunpack.c.l.b16 %v50
    %v59 = vunpack.c.l.b16 %v51
    %v60 = vpack.c.b16 %v59, %v58
    %v65 = vunpack.c.l.b16 %v52
    %v66 = vunpack.c.l.b16 %v53
    %v67 = vunpack.c.l.b16 %v54
    %v68 = vunpack.c.l.b16 %v55
    %v69 = vpack.c.b16 %v66, %v65
    %v70 = vpack.c.b16 %v68, %v67
    %vm73 = vcmask 261120
    %v75 = vsel %vm73, %v60, 0
    %77 = vmatprep.subr.bf16.mxu0 0
    %78 = vmatpush1.bf16.msra.mxu0 %v69
    %79 = vmatprep.subr.bf16.mxu0 0
    %80 = vmatpush1.bf16.msra.mxu0 %v70
    %81 = vmatprep.subr.bf16.mxu0 0
    %82 = vmatpush1.bf16.msra.mxu0 0
    %83 = vmatprep.subr.bf16.mxu0 0
    %84 = vmatpush1.bf16.msra.mxu0 0
    %85 = vmatprep.subr.bf16.mxu0 0
    %86 = vmatpush1.bf16.msra.mxu0 0
    %87 = vmatprep.subr.bf16.mxu0 0
    %88 = vmatpush1.bf16.msra.mxu0 0
    %89 = vmatprep.subr.bf16.mxu0 0
    %90 = vmatpush1.bf16.msra.mxu0 0
    %91 = vmatprep.subr.bf16.mxu0 0
    %92 = vmatpush1.bf16.msra.mxu0 0
    %93 = vmatprep.subr.bf16.mxu0 0
    %94 = vmatpush1.bf16.msra.mxu0 0
    %95 = vmatprep.subr.bf16.mxu0 0
    %96 = vmatpush1.bf16.msra.mxu0 0
    %97 = vmatprep.subr.bf16.mxu0 0
    %98 = vmatpush1.bf16.msra.mxu0 0
    %99 = vmatprep.subr.bf16.mxu0 0
    %100 = vmatpush1.bf16.msra.mxu0 0
    %101 = vmatprep.subr.bf16.mxu0 0
    %102 = vmatpush1.bf16.msra.mxu0 0
    %103 = vmatprep.subr.bf16.mxu0 0
    %104 = vmatpush1.bf16.msra.mxu0 0
    %105 = vmatprep.subr.bf16.mxu0 0
    %106 = vmatpush1.bf16.msra.mxu0 0
    %107 = vmatprep.subr.bf16.mxu0 0
    %108 = vmatpush1.bf16.msra.mxu0 0
    %109 = vmatprep.mubr.bf16.mxu0 0
    %110 = vmatmul.mubr.bf16.gmra.mrb[0].mxu0 %v75
    %v111 = vpop.f32.mrb[0].mxu0
    %v112 = vadd.f32 0.0, %v111
    %v113 = vpop.f32.mrb[0].mxu0
    %v114 = vpop.f32.mrb[0].mxu0
    %v115 = vadd.f32 0.0, %v114
    %v116 = vpop.f32.mrb[0].mxu0
    %117 = vdwg.mxu0
    %v118 = vadd.f32 %v48, %v112
    %v119 = vadd.f32 %v49, %v115
    %120 = vst.msk [vmem:[#allocation2] sm:$0xff] %vm73, %v118
    %121 = vst.msk [vmem:[#allocation2 + $0x8] sm:$0xff] %vm73, %v119
    // Predicated region
    $region22: #{tpu_custom_call.1} parent=1 // pred_check
      %p122 = pneg %p41
    $region23: #{tpu_custom_call.1} parent=1 // pred_check_branch
      %124 = sbr.rel (%p122) target = $region25
    $region24: #{tpu_custom_call.1} parent=1 // pred_region
      %v125 = vld [vmem:[#allocation2] sm:$0xff]
      %v126 = vld [vmem:[#allocation2 + $0x8] sm:$0xff]
      %127 = vst.msk [vmem:[#allocation8] sm:$0xff] %vm73, %v125
      %128 = vst.msk [vmem:[#allocation8 + $0x8] sm:$0xff] %vm73, %v126
    $region25: #{tpu_custom_call.1} parent=1 // pred_fallthru
      _
    // Predicated region
    $region26: #{tpu_custom_call.1} parent=1 // pred_check
      _
    $region27: #{tpu_custom_call.1} parent=1 // pred_check_branch
      %130 = sbr.rel (0) target = $region29
    $region28: #{tpu_custom_call.1} parent=1 // pred_region
      %s132 = ssub.s32 256, 256
      %133 = vsyncadd [#allocation5], %s132
      %s134 = sshll.u32 [#allocation8], 4
      %s135 = int_to_ptr.vmem [resolvable:$true] %s134
      %140 = dma.vmem_to_hbm [thread:$0]  %s135, 256, %s2, [#allocation5], 128, 128, 8
    $region29: #{tpu_custom_call.1} parent=1 // pred_fallthru
      _
    // Predicated region
    $region30: #{tpu_custom_call.1} parent=1 // pred_check
      _
    $region31: #{tpu_custom_call.1} parent=1 // pred_check_branch
      %142 = sbr.rel (0) target = $region33
    $region32: #{tpu_custom_call.1} parent=1 // pred_region
      %143 = dma.done [#allocation5], 256
    $region33: #{tpu_custom_call.1} parent=1 // pred_fallthru
      _
    %144 = vsyncpa [#allocation4], 1
    %145 = vsyncpa [#allocation7], 1
    %146 = vsyncpa [#allocation5], 1

</llo_original>
